<compile_context>
chip_gen: v7x
topology: tpu7x:2x2x1
jax: 0.10.0
libtpu: 0.0.40
codegen_flags: <defaults>
</compile_context>

<pallas_src>
import functools

import jax
import jax.numpy as jnp
from jax.experimental import pallas as pl
from jax.experimental.pallas import tpu as pltpu

_SUBLANE = 8
_MAX_SINGLE_STEP_BATCH = 2048   # one grid step up to here (per-step overhead >> work)
_DEFAULT_MULTI_TILE = 1024      # batch tile when streaming larger batches


def _round_up(x, m):
    return ((x + m - 1) // m) * m


def _mlp_kernel(x_ref, w1_ref, b1_ref, w2_ref, b2_ref, o_ref, *, output_activation):
    # hidden = relu(x @ W1 + b1) -- f32 accumulation on the MXU, bias/ReLU on VPU.
    x = x_ref[...]
    h = jnp.dot(x, w1_ref[...], preferred_element_type=jnp.float32) + b1_ref[...]
    h = jnp.maximum(h, 0.0)
    # out = h @ W2 + b2  (optional relu)
    y = jnp.dot(h, w2_ref[...], preferred_element_type=jnp.float32) + b2_ref[...]
    if output_activation == "relu":
        y = jnp.maximum(y, 0.0)
    o_ref[...] = y.astype(o_ref.dtype)


@functools.partial(jax.jit, static_argnames=("output_activation", "tm"))
def feedforward_mlp(x, w1, b1, w2, b2, output_activation=None, tm=None):
    """Fused 2-layer MLP forward.

    x  : [B, H]        float32
    w1 : [H, D]        float32  (already transposed vs. PyTorch's Linear weight)
    b1 : [D] or [1, D] float32
    w2 : [D, O]        float32  (already transposed vs. PyTorch's Linear weight)
    b2 : [O] or [1, O] float32
    returns [B, O]
    """
    if output_activation not in (None, "relu"):
        raise ValueError(
            f"Unsupported output_activation {output_activation!r}; only None or 'relu'.")

    B, H = x.shape
    D = w1.shape[1]
    O = w2.shape[1]
    b1 = b1.reshape(1, D)
    b2 = b2.reshape(1, O)
    out_dtype = jnp.promote_types(x.dtype, w1.dtype)

    # Batch tile selection: single step for small/medium batches; otherwise a
    # large sublane-aligned tile (per-tile VMEM is only tm*(H+D+O)*4B).
    if tm is None:
        tm_eff = B if B <= _MAX_SINGLE_STEP_BATCH else _DEFAULT_MULTI_TILE
    else:
        tm_eff = int(tm)
    if tm_eff >= B:
        tm_eff = B                      # block == full dim -> (8,128) rule waived
    else:
        tm_eff = _round_up(tm_eff, _SUBLANE)
        if tm_eff >= B:
            tm_eff = B
    grid_steps = pl.cdiv(B, tm_eff)     # ragged last block handled by Pallas masking
    grid = (grid_steps,)

    kernel = functools.partial(_mlp_kernel, output_activation=output_activation)

    # Logical (unpadded) flop / byte counts.
    cost = pl.CostEstimate(
        flops=2 * B * D * (H + O),
        transcendentals=0,
        bytes_accessed=4 * (B * H + H * D + D + D * O + O + B * O),
    )

    out = pl.pallas_call(
        kernel,
        out_shape=jax.ShapeDtypeStruct((B, O), out_dtype),
        grid=grid,
        in_specs=[
            # x: streamed over the batch axis; feature axis is full-extent.
            pl.BlockSpec((tm_eff, H), lambda i: (i, 0)),
            # Weights / biases: constant index_map -> fetched once, VMEM-resident.
            # (pipeline_mode=pl.Buffered(1) would drop their second buffer; only
            #  worth it if D grows to thousands — negligible at ~4 KB each.)
            pl.BlockSpec((H, D), lambda i: (0, 0)),
            pl.BlockSpec((1, D), lambda i: (0, 0)),
            pl.BlockSpec((D, O), lambda i: (0, 0)),
            pl.BlockSpec((1, O), lambda i: (0, 0)),
        ],
        out_specs=pl.BlockSpec((tm_eff, O), lambda i: (i, 0)),
        compiler_params=pltpu.CompilerParams(
            dimension_semantics=(
                ("arbitrary",) if grid_steps == 1 else ("parallel",)),
        ),
        cost_estimate=cost,
    )(x.astype(out_dtype), w1.astype(out_dtype), b1.astype(out_dtype),
      w2.astype(out_dtype), b2.astype(out_dtype))
    return out


def _reference(x, w1, b1, w2, b2, output_activation=None):
    h = jnp.maximum(x @ w1 + b1.reshape(1, -1), 0.0)
    y = h @ w2 + b2.reshape(1, -1)
    if output_activation == "relu":
        y = jnp.maximum(y, 0.0)
    return y


# TODO(synk): AN_model's graph stages (EdgeConvGat message passing / einsum over
# the adjacency, neighbor gather + mask fill, gated sigmoid mixing) are left to
# XLA; this kernel covers the fused Linear->ReLU->Linear (MLPBase) core of the
# forward pass.

if __name__ == "__main__":
    # Shapes consistent with the module: out_dim=16 feature width, hidden=32,
    # action head out_dim=16 (max_action). Three batch sizes: a tiny one, a
    # medium non-multiple-of-128 one (both single grid step), and a larger one
    # with an explicit tile to exercise the multi-step streamed path.
    hidden_in, hidden_mid, out_dim = 32, 32, 16
    batch_small = 8
    batch_mid = 300
    batch_big = 2048

    key = jax.random.PRNGKey(0)
    kx, kw1, kb1, kw2, kb2, kx2, kx3 = jax.random.split(key, 7)

    w1 = jax.random.normal(kw1, (hidden_in, hidden_mid), dtype=jnp.float32) / jnp.sqrt(hidden_in)
    b1 = jax.random.normal(kb1, (1, hidden_mid), dtype=jnp.float32) * 0.01
    w2 = jax.random.normal(kw2, (hidden_mid, out_dim), dtype=jnp.float32) / jnp.sqrt(hidden_mid)
    b2 = jax.random.normal(kb2, (1, out_dim), dtype=jnp.float32) * 0.01

    x_small = jax.random.normal(kx, (batch_small, hidden_in), dtype=jnp.float32)
    x_mid = jax.random.normal(kx2, (batch_mid, hidden_in), dtype=jnp.float32)
    x_big = jax.random.normal(kx3, (batch_big, hidden_in), dtype=jnp.float32)

    # Tiny batch, single grid step, no output activation.
    out_small = jax.block_until_ready(
        feedforward_mlp(x_small, w1, b1, w2, b2, output_activation=None))
    # Medium non-aligned batch, single grid step, ReLU output activation.
    out_mid = jax.block_until_ready(
        feedforward_mlp(x_mid, w1, b1, w2, b2, output_activation="relu"))
    # Larger batch streamed in 512-row tiles (grid of 4, "parallel" semantics).
    out_big = jax.block_until_ready(
        feedforward_mlp(x_big, w1, b1, w2, b2, output_activation=None, tm=512))

    ref_small = _reference(x_small, w1, b1, w2, b2, None)
    ref_mid = _reference(x_mid, w1, b1, w2, b2, "relu")
    ref_big = _reference(x_big, w1, b1, w2, b2, None)

    assert out_small.shape == (batch_small, out_dim)
    assert out_mid.shape == (batch_mid, out_dim)
    assert out_big.shape == (batch_big, out_dim)
    assert jnp.allclose(out_small, ref_small, atol=1e-5, rtol=1e-5)
    assert jnp.allclose(out_mid, ref_mid, atol=1e-5, rtol=1e-5)
    assert jnp.allclose(out_big, ref_big, atol=1e-5, rtol=1e-5)

    print("KERNEL_OK")
</pallas_src>

<mosaic_0001>
module attributes {stable_mosaic.version = 11 : i64} {
  func.func @_mlp_kernel(%arg0: i32, %arg1: memref<8x32xf32, #tpu.memory_space<vmem>>, %arg2: memref<32x32xf32, #tpu.memory_space<vmem>>, %arg3: memref<1x32xf32, #tpu.memory_space<vmem>>, %arg4: memref<32x16xf32, #tpu.memory_space<vmem>>, %arg5: memref<1x16xf32, #tpu.memory_space<vmem>>, %arg6: memref<8x16xf32, #tpu.memory_space<vmem>>) attributes {dimension_semantics = [#tpu.dimension_semantics<arbitrary>], iteration_bounds = array<i64: 1>, scalar_prefetch = 0 : i64, scratch_operands = 0 : i64, tpu.core_type = #tpu.core_type<tc>, window_params = [{transform_indices = @transform_0, window_bounds = array<i64: 8, 32>}, {pipeline_mode = #tpu.pipeline_mode<synchronous>, transform_indices = @transform_1, window_bounds = array<i64: 32, 32>}, {pipeline_mode = #tpu.pipeline_mode<synchronous>, transform_indices = @transform_2, window_bounds = array<i64: 1, 32>}, {pipeline_mode = #tpu.pipeline_mode<synchronous>, transform_indices = @transform_3, window_bounds = array<i64: 32, 16>}, {pipeline_mode = #tpu.pipeline_mode<synchronous>, transform_indices = @transform_4, window_bounds = array<i64: 1, 16>}, {transform_indices = @transform_5, window_bounds = array<i64: 8, 16>}]} {
    %c0 = arith.constant 0 : index
    %c0_0 = arith.constant 0 : index
    %0 = vector.load %arg1[%c0, %c0_0] : memref<8x32xf32, #tpu.memory_space<vmem>>, vector<8x32xf32>
    %c0_1 = arith.constant 0 : index
    %c0_2 = arith.constant 0 : index
    %1 = vector.load %arg2[%c0_1, %c0_2] : memref<32x32xf32, #tpu.memory_space<vmem>>, vector<32x32xf32>
    %cst = arith.constant dense<0.000000e+00> : vector<8x32xf32>
    %2 = tpu.matmul %0, %1, %cst {dimension_numbers = #tpu.dot_dimension_numbers<[1], [0], [0], [1], [0, 0, 1, 1], [], []>} : vector<8x32xf32>, vector<32x32xf32>, vector<8x32xf32> -> vector<8x32xf32>
    %c0_3 = arith.constant 0 : index
    %c0_4 = arith.constant 0 : index
    %3 = vector.load %arg3[%c0_3, %c0_4] : memref<1x32xf32, #tpu.memory_space<vmem>>, vector<1x32xf32>
    %4 = vector.broadcast %3 : vector<1x32xf32> to vector<8x32xf32>
    %5 = arith.addf %2, %4 : vector<8x32xf32>
    %cst_5 = arith.constant 0.000000e+00 : f32
    %6 = vector.broadcast %cst_5 : f32 to vector<8x32xf32>
    %7 = arith.maximumf %5, %6 : vector<8x32xf32>
    %c0_6 = arith.constant 0 : index
    %c0_7 = arith.constant 0 : index
    %8 = vector.load %arg4[%c0_6, %c0_7] : memref<32x16xf32, #tpu.memory_space<vmem>>, vector<32x16xf32>
    %cst_8 = arith.constant dense<0.000000e+00> : vector<8x16xf32>
    %9 = tpu.matmul %7, %8, %cst_8 {dimension_numbers = #tpu.dot_dimension_numbers<[1], [0], [0], [1], [0, 0, 1, 1], [], []>} : vector<8x32xf32>, vector<32x16xf32>, vector<8x16xf32> -> vector<8x16xf32>
    %c0_9 = arith.constant 0 : index
    %c0_10 = arith.constant 0 : index
    %10 = vector.load %arg5[%c0_9, %c0_10] : memref<1x16xf32, #tpu.memory_space<vmem>>, vector<1x16xf32>
    %11 = vector.broadcast %10 : vector<1x16xf32> to vector<8x16xf32>
    %12 = arith.addf %9, %11 : vector<8x16xf32>
    %c0_11 = arith.constant 0 : index
    %c0_12 = arith.constant 0 : index
    %13 = vector.load %arg6[%c0_11, %c0_12] : memref<8x16xf32, #tpu.memory_space<vmem>>, vector<8x16xf32>
    tpu.vector_store %arg6[%c0_11, %c0_12], %12 {strides = array<i32>} : memref<8x16xf32, #tpu.memory_space<vmem>>, vector<8x16xf32>,
    return
  }
  func.func @transform_0(%arg0: i32) -> (i32, i32) {
    %c0_i32 = arith.constant 0 : i32
    %c0_i32_0 = arith.constant 0 : i32
    return %arg0, %c0_i32 : i32, i32
  }
  func.func @transform_1(%arg0: i32) -> (i32, i32) {
    %c0_i32 = arith.constant 0 : i32
    %c0_i32_0 = arith.constant 0 : i32
    %c0_i32_1 = arith.constant 0 : i32
    return %c0_i32, %c0_i32_0 : i32, i32
  }
  func.func @transform_2(%arg0: i32) -> (i32, i32) {
    %c0_i32 = arith.constant 0 : i32
    %c0_i32_0 = arith.constant 0 : i32
    %c0_i32_1 = arith.constant 0 : i32
    return %c0_i32, %c0_i32_0 : i32, i32
  }
  func.func @transform_3(%arg0: i32) -> (i32, i32) {
    %c0_i32 = arith.constant 0 : i32
    %c0_i32_0 = arith.constant 0 : i32
    %c0_i32_1 = arith.constant 0 : i32
    return %c0_i32, %c0_i32_0 : i32, i32
  }
  func.func @transform_4(%arg0: i32) -> (i32, i32) {
    %c0_i32 = arith.constant 0 : i32
    %c0_i32_0 = arith.constant 0 : i32
    %c0_i32_1 = arith.constant 0 : i32
    return %c0_i32, %c0_i32_0 : i32, i32
  }
  func.func @transform_5(%arg0: i32) -> (i32, i32) {
    %c0_i32 = arith.constant 0 : i32
    %c0_i32_0 = arith.constant 0 : i32
    return %arg0, %c0_i32 : i32, i32
  }
}

</mosaic_0001>

<llo_original>
// kernel: feedforward_mlp.1
$region0: #{feedforward_mlp.1}
  #allocation0 [shape = 'u32[]', space=smem, size = 0x4, offset = 0x4, fixed_abs, tag = 'smem constant byte address 0x4 - core index']
  #allocation1 [shape = 'u32[144,128]{1,0:T(1,128)}', space=vmem, size = 0x12000, scoped, tag = 'internal scratch']
  %s0 = inlined_call_operand.vmem [shape: f32[8,32], index: 0, kind: input, shape index: {}]
  %s1 = inlined_call_operand.vmem [shape: f32[32,32], index: 1, kind: input, shape index: {}]
  %s2 = inlined_call_operand.vmem [shape: f32[1,32], index: 2, kind: input, shape index: {}]
  %s3 = inlined_call_operand.vmem [shape: f32[32,16], index: 3, kind: input, shape index: {}]
  %s4 = inlined_call_operand.vmem [shape: f32[1,16], index: 4, kind: input, shape index: {}]
  %s5 = inlined_call_operand.hbm [shape: f32[8,16], index: 5, kind: output, shape index: {}]
  %s6 = sld [smem:[#allocation0]]
  $region30: #{feedforward_mlp.1} parent=0
    _
  %s8 = ssub.s32 1, %s6
  %s9 = scalar_select 0, %s8, %s6
  $region1: #{feedforward_mlp.1} parent=0
    #allocation2 [shape = 'u8[4096]{0}', space=vmem, size = 0x1000, scoped, tag = 'output window, operand 0, single buffered']
    #allocation3 [shape = 's32[1]{0}', space=sflag, size = 0x4, scoped, tag = 'scoped memory for feedforward_mlp.1']
    %10 = vsyncpa [#allocation3], 0
    // Predicated region
    $region2: #{feedforward_mlp.1} parent=1 // pred_check
      _
    $region3: #{feedforward_mlp.1} parent=1 // pred_check_branch
      %12 = sbr.rel (0) target = $region5
    $region4: #{feedforward_mlp.1} parent=1 // pred_region
      _
    $region5: #{feedforward_mlp.1} parent=1 // pred_fallthru
      _
    // Predicated region
    $region6: #{feedforward_mlp.1} parent=1 // pred_check
      _
    $region7: #{feedforward_mlp.1} parent=1 // pred_check_branch
      %14 = sbr.rel (0) target = $region9
    $region8: #{feedforward_mlp.1} parent=1 // pred_region
      _
    $region9: #{feedforward_mlp.1} parent=1 // pred_fallthru
      _
    // Predicated region
    $region10: #{feedforward_mlp.1} parent=1 // pred_check
      _
    $region11: #{feedforward_mlp.1} parent=1 // pred_check_branch
      %16 = sbr.rel (0) target = $region13
    $region12: #{feedforward_mlp.1} parent=1 // pred_region
      _
    $region13: #{feedforward_mlp.1} parent=1 // pred_fallthru
      _
    // Predicated region
    $region14: #{feedforward_mlp.1} parent=1 // pred_check
      _
    $region15: #{feedforward_mlp.1} parent=1 // pred_check_branch
      %18 = sbr.rel (0) target = $region17
    $region16: #{feedforward_mlp.1} parent=1 // pred_region
      _
    $region17: #{feedforward_mlp.1} parent=1 // pred_fallthru
      _
    // Predicated region
    $region18: #{feedforward_mlp.1} parent=1 // pred_check
      _
    $region19: #{feedforward_mlp.1} parent=1 // pred_check_branch
      %20 = sbr.rel (0) target = $region21
    $region20: #{feedforward_mlp.1} parent=1 // pred_region
      _
    $region21: #{feedforward_mlp.1} parent=1 // pred_fallthru
      _
    %v21 = vld [vmem:[%s0] sm:$0xff]
    %v22 = vld [vmem:[%s1] sm:$0xff]
    %v23 = vld [vmem:[%s1 + $0x8] sm:$0xff]
    %v24 = vld [vmem:[%s1 + $0x10] sm:$0xff]
    %v25 = vld [vmem:[%s1 + $0x18] sm:$0xff]
    %v26 = vld [vmem:[%s2] sm:$0x1]
    %v28 = vlaneseq
    %v29 = vshrl.u32 %v28, 7
    %v30 = vsub.s32 0, %v29
    %v31 = vrot.slane %v26, %v30
    %vm33 = vcmask 261120
    %v35 = vsel %vm33, %v21, 0
    %37 = vmatprep.subr.mxu0 0.0
    %38 = vmatpush1.msra.mxu0 %v22
    %39 = vmatprep.subr.mxu0 0.0
    %40 = vmatpush1.msra.mxu0 %v23
    %41 = vmatprep.subr.mxu0 0.0
    %42 = vmatpush1.msra.mxu0 %v24
    %43 = vmatprep.subr.mxu0 0.0
    %44 = vmatpush1.msra.mxu0 %v25
    %45 = vmatprep.subr.mxu0 0.0
    %46 = vmatpush1.msra.mxu0 0.0
    %47 = vmatprep.subr.mxu0 0.0
    %48 = vmatpush1.msra.mxu0 0.0
    %49 = vmatprep.subr.mxu0 0.0
    %50 = vmatpush1.msra.mxu0 0.0
    %51 = vmatprep.subr.mxu0 0.0
    %52 = vmatpush1.msra.mxu0 0.0
    %53 = vmatprep.subr.mxu0 0.0
    %54 = vmatpush1.msra.mxu0 0.0
    %55 = vmatprep.subr.mxu0 0.0
    %56 = vmatpush1.msra.mxu0 0.0
    %57 = vmatprep.subr.mxu0 0.0
    %58 = vmatpush1.msra.mxu0 0.0
    %59 = vmatprep.subr.mxu0 0.0
    %60 = vmatpush1.msra.mxu0 0.0
    %61 = vmatprep.subr.mxu0 0.0
    %62 = vmatpush1.msra.mxu0 0.0
    %63 = vmatprep.subr.mxu0 0.0
    %64 = vmatpush1.msra.mxu0 0.0
    %65 = vmatprep.subr.mxu0 0.0
    %66 = vmatpush1.msra.mxu0 0.0
    %67 = vmatprep.subr.mxu0 0.0
    %68 = vmatpush1.msra.mxu0 0.0
    %69 = vmatprep.subr.mxu0 0.0
    %70 = vmatpush1.msra.mxu0 0.0
    %71 = vmatprep.subr.mxu0 0.0
    %72 = vmatpush1.msra.mxu0 0.0
    %73 = vmatprep.subr.mxu0 0.0
    %74 = vmatpush1.msra.mxu0 0.0
    %75 = vmatprep.subr.mxu0 0.0
    %76 = vmatpush1.msra.mxu0 0.0
    %77 = vmatprep.subr.mxu0 0.0
    %78 = vmatpush1.msra.mxu0 0.0
    %79 = vmatprep.subr.mxu0 0.0
    %80 = vmatpush1.msra.mxu0 0.0
    %81 = vmatprep.subr.mxu0 0.0
    %82 = vmatpush1.msra.mxu0 0.0
    %83 = vmatprep.subr.mxu0 0.0
    %84 = vmatpush1.msra.mxu0 0.0
    %85 = vmatprep.subr.mxu0 0.0
    %86 = vmatpush1.msra.mxu0 0.0
    %87 = vmatprep.subr.mxu0 0.0
    %88 = vmatpush1.msra.mxu0 0.0
    %89 = vmatprep.subr.mxu0 0.0
    %90 = vmatpush1.msra.mxu0 0.0
    %91 = vmatprep.subr.mxu0 0.0
    %92 = vmatpush1.msra.mxu0 0.0
    %93 = vmatprep.subr.mxu0 0.0
    %94 = vmatpush1.msra.mxu0 0.0
    %95 = vmatprep.subr.mxu0 0.0
    %96 = vmatpush1.msra.mxu0 0.0
    %97 = vmatprep.subr.mxu0 0.0
    %98 = vmatpush1.msra.mxu0 0.0
    %99 = vmatprep.subr.mxu0 0.0
    %100 = vmatpush1.msra.mxu0 0.0
    %101 = vmatprep.mubr.f32.mxu0 0.0
    %102 = vmatmul.mubr.f32.gmra.mrb[0].mxu0 %v35
    %v103 = vpop.f32.mrb[0].mxu0
    %v104 = vadd.f32 %v31, %v103
    %v105 = vpop.f32.mrb[0].mxu0
    %106 = vdwg.mxu0
    %v107 = vmax.f32 %v104, 0.0
    %v108 = vld [vmem:[%s3] sm:$0xff]
    %v109 = vld [vmem:[%s3 + $0x8] sm:$0xff]
    %v110 = vld [vmem:[%s3 + $0x10] sm:$0xff]
    %v111 = vld [vmem:[%s3 + $0x18] sm:$0xff]
    %v112 = vld [vmem:[%s4] sm:$0x1]
    %v114 = vlaneseq
    %v115 = vshrl.u32 %v114, 7
    %v116 = vsub.s32 0, %v115
    %v117 = vrot.slane %v112, %v116
    %v120 = vsel %vm33, %v107, 0
    %122 = vmatprep.subr.mxu0 0.0
    %123 = vmatpush1.msra.mxu0 %v108
    %124 = vmatprep.subr.mxu0 0.0
    %125 = vmatpush1.msra.mxu0 %v109
    %126 = vmatprep.subr.mxu0 0.0
    %127 = vmatpush1.msra.mxu0 %v110
    %128 = vmatprep.subr.mxu0 0.0
    %129 = vmatpush1.msra.mxu0 %v111
    %130 = vmatprep.subr.mxu0 0.0
    %131 = vmatpush1.msra.mxu0 0.0
    %132 = vmatprep.subr.mxu0 0.0
    %133 = vmatpush1.msra.mxu0 0.0
    %134 = vmatprep.subr.mxu0 0.0
    %135 = vmatpush1.msra.mxu0 0.0
    %136 = vmatprep.subr.mxu0 0.0
    %137 = vmatpush1.msra.mxu0 0.0
    %138 = vmatprep.subr.mxu0 0.0
    %139 = vmatpush1.msra.mxu0 0.0
    %140 = vmatprep.subr.mxu0 0.0
    %141 = vmatpush1.msra.mxu0 0.0
    %142 = vmatprep.subr.mxu0 0.0
    %143 = vmatpush1.msra.mxu0 0.0
    %144 = vmatprep.subr.mxu0 0.0
    %145 = vmatpush1.msra.mxu0 0.0
    %146 = vmatprep.subr.mxu0 0.0
    %147 = vmatpush1.msra.mxu0 0.0
    %148 = vmatprep.subr.mxu0 0.0
    %149 = vmatpush1.msra.mxu0 0.0
    %150 = vmatprep.subr.mxu0 0.0
    %151 = vmatpush1.msra.mxu0 0.0
    %152 = vmatprep.subr.mxu0 0.0
    %153 = vmatpush1.msra.mxu0 0.0
    %154 = vmatprep.subr.mxu0 0.0
    %155 = vmatpush1.msra.mxu0 0.0
    %156 = vmatprep.subr.mxu0 0.0
    %157 = vmatpush1.msra.mxu0 0.0
    %158 = vmatprep.subr.mxu0 0.0
    %159 = vmatpush1.msra.mxu0 0.0
    %160 = vmatprep.subr.mxu0 0.0
    %161 = vmatpush1.msra.mxu0 0.0
    %162 = vmatprep.subr.mxu0 0.0
    %163 = vmatpush1.msra.mxu0 0.0
    %164 = vmatprep.subr.mxu0 0.0
    %165 = vmatpush1.msra.mxu0 0.0
    %166 = vmatprep.subr.mxu0 0.0
    %167 = vmatpush1.msra.mxu0 0.0
    %168 = vmatprep.subr.mxu0 0.0
    %169 = vmatpush1.msra.mxu0 0.0
    %170 = vmatprep.subr.mxu0 0.0
    %171 = vmatpush1.msra.mxu0 0.0
    %172 = vmatprep.subr.mxu0 0.0
    %173 = vmatpush1.msra.mxu0 0.0
    %174 = vmatprep.subr.mxu0 0.0
    %175 = vmatpush1.msra.mxu0 0.0
    %176 = vmatprep.subr.mxu0 0.0
    %177 = vmatpush1.msra.mxu0 0.0
    %178 = vmatprep.subr.mxu0 0.0
    %179 = vmatpush1.msra.mxu0 0.0
    %180 = vmatprep.subr.mxu0 0.0
    %181 = vmatpush1.msra.mxu0 0.0
    %182 = vmatprep.subr.mxu0 0.0
    %183 = vmatpush1.msra.mxu0 0.0
    %184 = vmatprep.subr.mxu0 0.0
    %185 = vmatpush1.msra.mxu0 0.0
    %186 = vmatprep.mubr.f32.mxu0 0.0
    %187 = vmatmul.mubr.f32.gmra.mrb[0].mxu0 %v120
    %v188 = vpop.f32.mrb[0].mxu0
    %v189 = vadd.f32 %v117, %v188
    %v190 = vpop.f32.mrb[0].mxu0
    %191 = vdwg.mxu0
    %vm192 = vcmask 130048
    %193 = vst.msk [vmem:[#allocation2] sm:$0xff] %vm192, %v189
    // Predicated region
    $region22: #{feedforward_mlp.1} parent=1 // pred_check
      _
    $region23: #{feedforward_mlp.1} parent=1 // pred_check_branch
      %195 = sbr.rel (0) target = $region25
    $region24: #{feedforward_mlp.1} parent=1 // pred_region
      %s197 = ssub.s32 128, 128
      %198 = vsyncadd [#allocation3], %s197
      %s200 = sshll.u32 [#allocation2], 4
      %s201 = int_to_ptr.vmem [resolvable:$true] %s200
      %203 = dma.vmem_to_hbm [thread:$0]  %s201, 128, %s5, [#allocation3]
    $region25: #{feedforward_mlp.1} parent=1 // pred_fallthru
      _
    // Predicated region
    $region26: #{feedforward_mlp.1} parent=1 // pred_check
      _
    $region27: #{feedforward_mlp.1} parent=1 // pred_check_branch
      %205 = sbr.rel (0) target = $region29
    $region28: #{feedforward_mlp.1} parent=1 // pred_region
      %206 = dma.done [#allocation3], 128
    $region29: #{feedforward_mlp.1} parent=1 // pred_fallthru
      _
    %207 = vsyncpa [#allocation3], 1

</llo_original>
